<compile_context>
chip_gen: v6e
topology: v6e:2x2x1
jax: 0.10.0
libtpu: 0.0.40
codegen_flags: <defaults>
</compile_context>

<pallas_src>
import functools

import jax
import jax.numpy as jnp
from jax.experimental import pallas as pl
from jax.experimental.pallas import tpu as pltpu


def _focal_ce_partial_kernel(logits_ref, target_ref, out_ref, acc_ref, *,
                             n_total, tile_n, tiles_per_part):
    p_idx = pl.program_id(0)     # "parallel" partition (megacore shard on v7x)
    i = pl.program_id(1)         # "arbitrary" reduction step within partition

    @pl.when(i == 0)
    def _init():
        acc_ref[...] = jnp.zeros_like(acc_ref)

    x = logits_ref[...].astype(jnp.float32)          # (tile_n, C)
    tgt = target_ref[...]                            # (tile_n, 1) int32
    tn, c = x.shape

    # Numerically-stable log-sum-exp along the class (lane) dim.
    m = jnp.max(x, axis=-1, keepdims=True)                                  # (tn, 1)
    lse = jnp.log(jnp.sum(jnp.exp(x - m), axis=-1, keepdims=True)) + m      # (tn, 1)

    # Gather the target-class logit with a select (one VPU select per element
    # instead of a one-hot cast+mul).
    class_ids = jax.lax.broadcasted_iota(jnp.int32, (tn, c), 1)             # (tn, C)
    picked = jnp.sum(jnp.where(class_ids == tgt, x, 0.0),
                     axis=-1, keepdims=True)                                # (tn, 1)

    ce = lse - picked                                                       # (tn, 1)

    # Mask tail / over-allocated rows using the *logical* (unclamped) tile
    # index so clamped duplicate tiles contribute exactly zero.
    row_in_tile = jax.lax.broadcasted_iota(jnp.int32, (tn, 1), 0)
    global_row = (p_idx * tiles_per_part + i) * tile_n + row_in_tile
    ce = jnp.where(global_row < n_total, ce, 0.0)

    acc_ref[...] += jnp.sum(ce, axis=(0, 1), keepdims=True)                 # (1, 1)

    @pl.when(i == tiles_per_part - 1)
    def _finalize():
        # One lane-dense (8,128) unmasked store per partition; the wrapper
        # reads element [0, 0].
        out_ref[...] = jnp.broadcast_to(acc_ref[...], out_ref.shape)


def focal_loss(logits, targets, gamma=2.0, tile_n=None):
    """logits: (N, C) float (f32 or bf16 -- DMA'd in its input dtype, upcast to
    f32 inside the kernel); targets: (N,) integer class indices.
    Returns a scalar f32 loss matching the PyTorch FocalLoss module."""
    n, c = logits.shape
    targets2d = targets.astype(jnp.int32).reshape(n, 1)

    # ---- tile sizing: conservative, per-generation-safe VMEM budget ----
    itemsize = jnp.dtype(logits.dtype).itemsize
    n_rounded = ((n + 7) // 8) * 8
    if tile_n is None:
        # ~6 MiB per logits pipeline buffer (x2 buffers) fits v5e's 16 MiB
        # default scoped VMEM and leaves ample headroom on v6e/v7x.
        budget_rows = max(8, (6 * 1024 * 1024) // max(1, c * itemsize))
        tile_n = int(min(n_rounded, (budget_rows // 8) * 8))
    tile_n = max(8, int(tile_n))

    total_tiles = pl.cdiv(n, tile_n)
    num_parts = 2 if total_tiles >= 2 else 1   # v7x: one partition per TensorCore
    tiles_per_part = pl.cdiv(total_tiles, num_parts)

    def _block_index_map(p, i):
        # Clamp so an over-allocated (p, i) never DMAs a fully out-of-bounds
        # block; the in-kernel row mask zeroes that block's contribution.
        t = jnp.minimum(p * tiles_per_part + i, total_tiles - 1)
        return (t, 0)

    kernel = functools.partial(_focal_ce_partial_kernel, n_total=n,
                               tile_n=tile_n, tiles_per_part=tiles_per_part)

    partials = pl.pallas_call(
        kernel,
        out_shape=jax.ShapeDtypeStruct((num_parts, 8, 128), jnp.float32),
        grid_spec=pltpu.PrefetchScalarGridSpec(
            num_scalar_prefetch=0,
            grid=(num_parts, tiles_per_part),
            in_specs=[
                pl.BlockSpec((tile_n, c), _block_index_map),   # logits tile
                pl.BlockSpec((tile_n, 1), _block_index_map),   # targets tile
            ],
            out_specs=pl.BlockSpec((1, 8, 128), lambda p, i: (p, 0, 0)),
            scratch_shapes=[pltpu.VMEM((1, 1), jnp.float32)],
        ),
        compiler_params=pltpu.CompilerParams(
            dimension_semantics=("parallel", "arbitrary"),
            vmem_limit_bytes=32 * 1024 * 1024,
        ),
    )(logits, targets2d)

    # Trivial scalar epilogue: combine partial CE sums -> mean CE -> focal.
    ce_sum = jnp.sum(partials[:, 0, 0])
    logp = ce_sum / jnp.float32(n)
    p = jnp.exp(-logp)
    omp = 1.0 - p
    g = float(gamma)
    if g == 2.0:
        focal = omp * omp                       # avoid pow -> log/exp on the EUP
    elif g.is_integer() and g >= 0.0:
        focal = omp ** int(g)
    else:
        focal = jnp.power(jnp.maximum(omp, 0.0), g)  # guard p>1 numerical noise
    return focal * logp


def _reference(logits, targets, gamma):
    logz = jax.nn.logsumexp(logits.astype(jnp.float32), axis=-1)
    picked = jnp.take_along_axis(logits.astype(jnp.float32),
                                 targets[:, None], axis=-1)[:, 0]
    logp = jnp.mean(logz - picked)
    p = jnp.exp(-logp)
    return (1.0 - p) ** gamma * logp


if __name__ == "__main__":
    key = jax.random.PRNGKey(0)
    k1, k2, k3, k4 = jax.random.split(key, 4)

    # Case 1: small shape from the module spec (single tile, single partition).
    N, C = 8, 32
    logits = jax.random.normal(k1, (N, C), dtype=jnp.float32)
    targets = jax.random.randint(k2, (N,), 0, C, dtype=jnp.int32)
    loss = focal_loss(logits, targets, gamma=2.0)
    jax.block_until_ready(loss)
    ref = _reference(logits, targets, 2.0)
    assert jnp.allclose(loss, ref, atol=1e-5, rtol=1e-5), (loss, ref)

    # Case 2: exercises the tiled / masked / two-partition ("parallel") path:
    # N not a multiple of the tile, uneven split across partitions.
    N2, C2 = 50, 128
    logits2 = jax.random.normal(k3, (N2, C2), dtype=jnp.float32)
    targets2 = jax.random.randint(k4, (N2,), 0, C2, dtype=jnp.int32)
    loss2 = focal_loss(logits2, targets2, gamma=2.0, tile_n=8)
    jax.block_until_ready(loss2)
    ref2 = _reference(logits2, targets2, 2.0)
    assert jnp.allclose(loss2, ref2, atol=1e-5, rtol=1e-5), (loss2, ref2)

    print("KERNEL_OK")
</pallas_src>

<mosaic_0001>
module attributes {stable_mosaic.version = 11 : i64} {
  func.func @_focal_ce_partial_kernel(%arg0: i32, %arg1: i32, %arg2: memref<8x32xf32, #tpu.memory_space<vmem>>, %arg3: memref<8x1xi32, #tpu.memory_space<vmem>>, %arg4: memref<1x8x128xf32, #tpu.memory_space<vmem>>, %arg5: memref<1x1xf32, #tpu.memory_space<vmem>>) attributes {dimension_semantics = [#tpu.dimension_semantics<parallel>, #tpu.dimension_semantics<arbitrary>], iteration_bounds = array<i64: 1, 1>, scalar_prefetch = 0 : i64, scratch_operands = 1 : i64, tpu.core_type = #tpu.core_type<tc>, window_params = [{transform_indices = @transform_0, window_bounds = array<i64: 8, 32>}, {transform_indices = @transform_1, window_bounds = array<i64: 8, 1>}, {transform_indices = @transform_2, window_bounds = array<i64: 1, 8, 128>}]} {
    %c0_i32 = arith.constant 0 : i32
    %0 = arith.cmpi eq, %arg1, %c0_i32 : i32
    %1 = arith.extui %0 : i1 to i32
    %c0_i32_0 = arith.constant 0 : i32
    %2 = arith.cmpi ne, %1, %c0_i32_0 : i32
    scf.if %2 {
      %cst_16 = arith.constant 0.000000e+00 : f32
      %43 = vector.broadcast %cst_16 : f32 to vector<1x1xf32>
      %c0_17 = arith.constant 0 : index
      %c0_18 = arith.constant 0 : index
      %44 = vector.load %arg5[%c0_17, %c0_18] : memref<1x1xf32, #tpu.memory_space<vmem>>, vector<1x1xf32>
      tpu.vector_store %arg5[%c0_17, %c0_18], %43 {strides = array<i32>} : memref<1x1xf32, #tpu.memory_space<vmem>>, vector<1x1xf32>,
    } else {
    }
    %c0 = arith.constant 0 : index
    %c0_1 = arith.constant 0 : index
    %3 = vector.load %arg2[%c0, %c0_1] : memref<8x32xf32, #tpu.memory_space<vmem>>, vector<8x32xf32>
    %c0_2 = arith.constant 0 : index
    %c0_3 = arith.constant 0 : index
    %4 = vector.load %arg3[%c0_2, %c0_3] : memref<8x1xi32, #tpu.memory_space<vmem>>, vector<8x1xi32>
    %cst = arith.constant dense<0xFF800000> : vector<8xf32>
    %5 = vector.multi_reduction <maximumf>, %3, %cst [1] : vector<8x32xf32> to vector<8xf32>
    %6 = vector.shape_cast %5 : vector<8xf32> to vector<8x1xf32>
    %7 = vector.broadcast %6 : vector<8x1xf32> to vector<8x32xf32>
    %8 = arith.subf %3, %7 : vector<8x32xf32>
    %9 = math.exp %8 : vector<8x32xf32>
    %cst_4 = arith.constant dense<0.000000e+00> : vector<8xf32>
    %10 = vector.multi_reduction <add>, %9, %cst_4 [1] : vector<8x32xf32> to vector<8xf32>
    %11 = vector.shape_cast %10 : vector<8xf32> to vector<8x1xf32>
    %12 = math.log %11 : vector<8x1xf32>
    %13 = arith.addf %12, %6 : vector<8x1xf32>
    %14 = tpu.iota {dimensions = array<i32: 1>} : vector<8x32xi32>
    %15 = vector.broadcast %4 : vector<8x1xi32> to vector<8x32xi32>
    %16 = arith.cmpi eq, %14, %15 : vector<8x32xi32>
    %cst_5 = arith.constant 0.000000e+00 : f32
    %17 = vector.broadcast %cst_5 : f32 to vector<8x32xf32>
    %18 = arith.select %16, %3, %17 : vector<8x32xi1>, vector<8x32xf32>
    %cst_6 = arith.constant dense<0.000000e+00> : vector<8xf32>
    %19 = vector.multi_reduction <add>, %18, %cst_6 [1] : vector<8x32xf32> to vector<8xf32>
    %20 = vector.shape_cast %19 : vector<8xf32> to vector<8x1xf32>
    %21 = arith.subf %13, %20 : vector<8x1xf32>
    %22 = tpu.iota {dimensions = array<i32: 0>} : vector<8x1xi32>
    %c1_i32 = arith.constant 1 : i32
    %23 = arith.muli %arg0, %c1_i32 : i32
    %24 = arith.addi %23, %arg1 : i32
    %c8_i32 = arith.constant 8 : i32
    %25 = arith.muli %24, %c8_i32 : i32
    %26 = vector.broadcast %25 : i32 to vector<8x1xi32>
    %27 = arith.addi %26, %22 : vector<8x1xi32>
    %c8_i32_7 = arith.constant 8 : i32
    %28 = vector.broadcast %c8_i32_7 : i32 to vector<8x1xi32>
    %29 = arith.cmpi slt, %27, %28 : vector<8x1xi32>
    %cst_8 = arith.constant 0.000000e+00 : f32
    %30 = vector.broadcast %cst_8 : f32 to vector<8x1xf32>
    %31 = arith.select %29, %21, %30 : vector<8x1xi1>, vector<8x1xf32>
    %c0_9 = arith.constant 0 : index
    %c0_10 = arith.constant 0 : index
    %32 = vector.load %arg5[%c0_9, %c0_10] : memref<1x1xf32, #tpu.memory_space<vmem>>, vector<1x1xf32>
    %33 = vector.shape_cast %31 : vector<8x1xf32> to vector<1x8x1xf32>
    %cst_11 = arith.constant dense<0.000000e+00> : vector<1xf32>
    %34 = vector.multi_reduction <add>, %33, %cst_11 [1, 2] : vector<1x8x1xf32> to vector<1xf32>
    %35 = vector.shape_cast %34 : vector<1xf32> to vector<1x1x1xf32>
    %36 = vector.extract %35[0, 0, 0] : f32 from vector<1x1x1xf32>
    %37 = vector.broadcast %36 : f32 to vector<1x1xf32>
    %38 = arith.addf %32, %37 : vector<1x1xf32>
    %c0_12 = arith.constant 0 : index
    %c0_13 = arith.constant 0 : index
    %39 = vector.load %arg5[%c0_12, %c0_13] : memref<1x1xf32, #tpu.memory_space<vmem>>, vector<1x1xf32>
    tpu.vector_store %arg5[%c0_12, %c0_13], %38 {strides = array<i32>} : memref<1x1xf32, #tpu.memory_space<vmem>>, vector<1x1xf32>,
    %c0_i32_14 = arith.constant 0 : i32
    %40 = arith.cmpi eq, %arg1, %c0_i32_14 : i32
    %41 = arith.extui %40 : i1 to i32
    %c0_i32_15 = arith.constant 0 : i32
    %42 = arith.cmpi ne, %41, %c0_i32_15 : i32
    scf.if %42 {
      %c0_16 = arith.constant 0 : index
      %c0_17 = arith.constant 0 : index
      %43 = vector.load %arg5[%c0_16, %c0_17] : memref<1x1xf32, #tpu.memory_space<vmem>>, vector<1x1xf32>
      %44 = vector.shape_cast %43 : vector<1x1xf32> to vector<1x1x1xf32>
      %45 = vector.broadcast %44 : vector<1x1x1xf32> to vector<1x8x128xf32>
      %c0_18 = arith.constant 0 : index
      %c0_19 = arith.constant 0 : index
      %c0_20 = arith.constant 0 : index
      %46 = vector.load %arg4[%c0_18, %c0_19, %c0_20] : memref<1x8x128xf32, #tpu.memory_space<vmem>>, vector<1x8x128xf32>
      tpu.vector_store %arg4[%c0_18, %c0_19, %c0_20], %45 {strides = array<i32>} : memref<1x8x128xf32, #tpu.memory_space<vmem>>, vector<1x8x128xf32>,
    } else {
    }
    return
  }
  func.func @transform_0(%arg0: i32, %arg1: i32) -> (i32, i32) {
    %c1_i32 = arith.constant 1 : i32
    %0 = arith.muli %arg0, %c1_i32 : i32
    %1 = arith.addi %0, %arg1 : i32
    %c0_i32 = arith.constant 0 : i32
    %2 = arith.minsi %1, %c0_i32 : i32
    %c0_i32_0 = arith.constant 0 : i32
    %c0_i32_1 = arith.constant 0 : i32
    return %2, %c0_i32_0 : i32, i32
  }
  func.func @transform_1(%arg0: i32, %arg1: i32) -> (i32, i32) {
    %c1_i32 = arith.constant 1 : i32
    %0 = arith.muli %arg0, %c1_i32 : i32
    %1 = arith.addi %0, %arg1 : i32
    %c0_i32 = arith.constant 0 : i32
    %2 = arith.minsi %1, %c0_i32 : i32
    %c0_i32_0 = arith.constant 0 : i32
    %c0_i32_1 = arith.constant 0 : i32
    return %2, %c0_i32_0 : i32, i32
  }
  func.func @transform_2(%arg0: i32, %arg1: i32) -> (i32, i32, i32) {
    %c0_i32 = arith.constant 0 : i32
    %c0_i32_0 = arith.constant 0 : i32
    %c0_i32_1 = arith.constant 0 : i32
    return %arg0, %c0_i32, %c0_i32_0 : i32, i32, i32
  }
}

</mosaic_0001>

<llo_original>
// kernel: tpu_custom_call.1
$region0: #{tpu_custom_call.1}
  #allocation0 [shape = 'u32[]', space=smem, size = 0x4, offset = 0x4, fixed_abs, tag = 'smem constant byte address 0x4 - core index']
  #allocation1 [shape = 'u32[144,128]{1,0:T(1,128)}', space=vmem, size = 0x12000, scoped, tag = 'internal scratch']
  #allocation2 [shape = 'f32[1,1]{1,0:T(1,128)}', space=vmem, size = 0x200, scoped, tag = 'scratch operand']
  %s0 = inlined_call_operand.vmem [shape: f32[8,32], index: 0, kind: input, shape index: {}]
  %s1 = inlined_call_operand.vmem [shape: s32[8,1], index: 1, kind: input, shape index: {}]
  %s2 = inlined_call_operand.hbm [shape: f32[1,8,128], index: 2, kind: output, shape index: {}]
  %s3 = sld [smem:[#allocation0]]
  $region26: #{tpu_custom_call.1} parent=0
    _
  %s5 = ssub.s32 1, %s3
  %s6 = scalar_select 0, %s5, %s3
  $region1: #{tpu_custom_call.1} parent=0
    #allocation3 [shape = 'u8[4096]{0}', space=vmem, size = 0x1000, scoped, tag = 'output window, operand 0, single buffered']
    #allocation4 [shape = 's32[1]{0}', space=sflag, size = 0x4, scoped, tag = 'scoped memory for tpu_custom_call.1']
    %7 = vsyncpa [#allocation4], 0
    // Predicated region
    $region2: #{tpu_custom_call.1} parent=1 // pred_check
      _
    $region3: #{tpu_custom_call.1} parent=1 // pred_check_branch
      %9 = sbr.rel (0) target = $region5
    $region4: #{tpu_custom_call.1} parent=1 // pred_region
      %s10 = sadd.s32 0, 0
      %p11 = scmp.lt.s32.totalorder %s10, 0
      %s12 = scalar_select %p11, %s10, 0
      %p13 = scmp.lt.s32.totalorder %s12, 0
      %s14 = scalar_select %p13, %s12, 0
      %s15 = smul.addr %s14, 8
      %s16 = scalar_lea.vmem %s0, %s15
      %s17 = sadd.s32 0, 0
      %p18 = scmp.lt.s32.totalorder %s17, 0
      %s19 = scalar_select %p18, %s17, 0
    $region5: #{tpu_custom_call.1} parent=1 // pred_fallthru
      _
    // Predicated region
    $region6: #{tpu_custom_call.1} parent=1 // pred_check
      _
    $region7: #{tpu_custom_call.1} parent=1 // pred_check_branch
      %21 = sbr.rel (0) target = $region9
    $region8: #{tpu_custom_call.1} parent=1 // pred_region
      %s22 = sadd.s32 0, 0
      %p23 = scmp.lt.s32.totalorder %s22, 0
      %s24 = scalar_select %p23, %s22, 0
      %p25 = scmp.lt.s32.totalorder %s24, 0
      %s26 = scalar_select %p25, %s24, 0
      %s27 = smul.addr %s26, 8
      %s28 = scalar_lea.vmem %s1, %s27
      %s29 = sadd.s32 0, 0
      %p30 = scmp.lt.s32.totalorder %s29, 0
      %s31 = scalar_select %p30, %s29, 0
    $region9: #{tpu_custom_call.1} parent=1 // pred_fallthru
      _
    %s32 = sadd.s32 0, 0
    %p33 = scmp.lt.s32.totalorder %s32, 0
    %s34 = scalar_select %p33, %s32, 0
    %p35 = scmp.lt.s32.totalorder %s34, 0
    %s36 = scalar_select %p35, %s34, 0
    %s37 = smul.addr %s36, 8
    %s38 = scalar_lea.vmem %s0, %s37
    %s39 = sadd.s32 0, 0
    %p40 = scmp.lt.s32.totalorder %s39, 0
    %s41 = scalar_select %p40, %s39, 0
    %p42 = scmp.lt.s32.totalorder %s41, 0
    %s43 = scalar_select %p42, %s41, 0
    %s44 = smul.addr %s43, 8
    %s45 = scalar_lea.vmem %s1, %s44
    %s46 = sadd.s32 0, 0
    %p47 = scmp.lt.s32.totalorder %s46, 0
    %s48 = scalar_select %p47, %s46, 0
    %p49 = scmp.lt.s32.totalorder %s48, 0
    %s50 = scalar_select %p49, %s48, 0
    %s51 = smul.addr %s50, 8
    %s52 = scalar_lea.vmem %s0, %s51
    %s53 = sadd.s32 0, 0
    %p54 = scmp.lt.s32.totalorder %s53, 0
    %s55 = scalar_select %p54, %s53, 0
    %s56 = sadd.s32 0, 0
    %p57 = scmp.lt.s32.totalorder %s56, 0
    %s58 = scalar_select %p57, %s56, 0
    %p59 = scmp.lt.s32.totalorder %s58, 0
    %s60 = scalar_select %p59, %s58, 0
    %s61 = smul.addr %s60, 8
    %s62 = scalar_lea.vmem %s1, %s61
    %s63 = sadd.s32 0, 0
    %p64 = scmp.lt.s32.totalorder %s63, 0
    %s65 = scalar_select %p64, %s63, 0
    %p66 = scmp.eq.s32.totalorder 0, 0
    // Predicated region
    $region10: #{tpu_custom_call.1} parent=1 // pred_check
      %p67 = pneg %p66
    $region11: #{tpu_custom_call.1} parent=1 // pred_check_branch
      %69 = sbr.rel (%p67) target = $region13
    $region12: #{tpu_custom_call.1} parent=1 // pred_region
      %vm70 = vcmask 0
      %71 = vst.msk [vmem:[#allocation2] sm:$0x1] %vm70, 0.0
    $region13: #{tpu_custom_call.1} parent=1 // pred_fallthru
      _
    %v72 = vld [vmem:[%s52] sm:$0xff]
    %v73 = vld [vmem:[%s62] sm:$0xff]
    %vm74 = vcmask 261120
    %v75 = vsel %vm74, %v72, -inf
    %76 = vmax.xlane.f32.xlu0 %v75
    %v77 = vpop.xlane.xlu0 %76
    %v78 = vsub.f32 %v72, %v77
    %v79 = vmul.f32 %v78, 1.442695
    %v80 = vpow.pop %v79
    %v81 = vsel %vm74, %v80, 0.0
    %82 = vadd.xlane.f32.xlu0 %v81
    %v83 = vpop.xlane.xlu0 %82
    %v84 = vlog2.pop %v83
    %v85 = vmul.f32 %v84, 0.6931472
    %v86 = vadd.f32 %v85, %v77
    %v87 = vlaneseq
    %v88 = vand.u32 %v87, 127
    %89 = vset.pattern.permute.xlu0 0
    %90 = vperm.xlu0 %89, %v73
    %v91 = vpop.permute.xlu0 %90
    %vm92 = vcmp.eq.s32.totalorder %v88, %v91
    %v93 = vsel %vm92, %v72, 0.0
    %v94 = vsel %vm74, %v93, 0.0
    %95 = vadd.xlane.f32.xlu0 %v94
    %v96 = vpop.xlane.xlu0 %95
    %v97 = vsub.f32 %v86, %v96
    %v98 = vlaneseq
    %v99 = vshrl.u32 %v98, 7
    %s100 = sadd.s32 0, 0
    %s101 = smul.u32 %s100, 8
    %v102 = vstv %s101
    %v103 = vadd.s32 %v102, %v99
    %vm104 = vcmp.lt.s32.totalorder %v103, 8
    %v105 = vsel %vm104, %v97, 0.0
    %v106 = vld [vmem:[#allocation2] sm:$0x1]
    %vm107 = vcmask 7168
    %v108 = vsel %vm107, %v105, 0.0
    %109 = vadd.xlane.f32.xlu0 %v108
    %v110 = vpop.xlane.xlu0 %109
    %v111 = vrot.slane %v110, 4
    %v112 = vadd.f32 %v110, %v111
    %v113 = vrot.slane %v112, 2
    %v114 = vadd.f32 %v112, %v113
    %v115 = vrot.slane %v114, 1
    %v116 = vadd.f32 %v114, %v115
    %s117 = vtos %v116
    %v118 = vstv %s117
    %v119 = vadd.f32 %v106, %v118
    %vm120 = vcmask 0
    %121 = vst.msk [vmem:[#allocation2] sm:$0x1] %vm120, %v119
    // Predicated region
    $region14: #{tpu_custom_call.1} parent=1 // pred_check
      %p122 = pneg %p66
    $region15: #{tpu_custom_call.1} parent=1 // pred_check_branch
      %124 = sbr.rel (%p122) target = $region17
    $region16: #{tpu_custom_call.1} parent=1 // pred_region
      %v125 = vld [vmem:[#allocation2] sm:$0x1]
      %v127 = vlaneseq
      %v128 = vshrl.u32 %v127, 7
      %v129 = vsub.s32 0, %v128
      %v130 = vrot.slane %v125, %v129
      %131 = vset.pattern.permute.xlu0 0
      %132 = vperm.xlu0 %131, %v130
      %v133 = vpop.permute.xlu0 %132
      %135 = vst [vmem:[#allocation3] sm:$0xff] %v133
    $region17: #{tpu_custom_call.1} parent=1 // pred_fallthru
      _
    // Predicated region
    $region18: #{tpu_custom_call.1} parent=1 // pred_check
      _
    $region19: #{tpu_custom_call.1} parent=1 // pred_check_branch
      %137 = sbr.rel (0) target = $region21
    $region20: #{tpu_custom_call.1} parent=1 // pred_region
      %s139 = ssub.s32 128, 128
      %140 = vsyncadd [#allocation4], %s139
      %s142 = sshll.u32 [#allocation3], 4
      %s143 = int_to_ptr.vmem [resolvable:$true] %s142
      %145 = dma.vmem_to_hbm [thread:$0]  %s143, 128, %s2, [#allocation4]
    $region21: #{tpu_custom_call.1} parent=1 // pred_fallthru
      _
    // Predicated region
    $region22: #{tpu_custom_call.1} parent=1 // pred_check
      _
    $region23: #{tpu_custom_call.1} parent=1 // pred_check_branch
      %147 = sbr.rel (0) target = $region25
    $region24: #{tpu_custom_call.1} parent=1 // pred_region
      %148 = dma.done [#allocation4], 128
    $region25: #{tpu_custom_call.1} parent=1 // pred_fallthru
      _
    %149 = vsyncpa [#allocation4], 1

</llo_original>
